<compile_context>
chip_gen: v5e
topology: v5e:2x2
jax: 0.10.0
libtpu: 0.0.40
codegen_flags: <defaults>
</compile_context>

<pallas_src>
import math

import jax
import jax.numpy as jnp
from jax.experimental import pallas as pl
from jax.experimental.pallas import tpu as pltpu

# ----------------------------- configuration ------------------------------
B = 2           # batch
S = 8           # sequence length (token ids per example)
VOCAB = 128     # embedding vocabulary size
D_MODEL = 32    # embedding width (d_model)
TILE_T = 8      # tokens gathered per grid step (amortizes grid overhead,
                # gives TILE_T outstanding row DMAs per step)
SCALE = math.sqrt(D_MODEL)


# ------------------------------ kernel -------------------------------------
def embedding_gather_kernel(ids_ref, table_hbm, o_ref, rows_vmem, sem):
    # ids_ref:   (T_pad,)            int32  token ids, scalar-prefetched to SMEM
    # table_hbm: (VOCAB, D_MODEL)    f32    embedding table, left in HBM (pl.ANY)
    # o_ref:     (TILE_T, D_MODEL)   f32    output tile (VMEM, auto-pipelined)
    # rows_vmem: (TILE_T, D_MODEL)   f32    DMA landing slab (scratch)
    # sem:       (TILE_T,)           DMA semaphores (one per outstanding copy)
    t0 = pl.program_id(0) * TILE_T

    # Issue all TILE_T row gathers before waiting on any of them: the small
    # (D_MODEL*4 B) row copies are latency-bound, so keeping them all in
    # flight overlaps their latency (matters most on v5e's lower HBM BW).
    copies = []
    for t in range(TILE_T):                      # static unroll
        tok = ids_ref[t0 + t]
        # Guard out-of-range ids (PyTorch nn.Embedding would raise); also
        # guarantees the HBM DMA below stays in bounds.
        tok = jnp.minimum(jnp.maximum(tok, 0), VOCAB - 1)
        cp = pltpu.make_async_copy(
            table_hbm.at[pl.ds(tok, 1), :],      # one (1, D_MODEL) row in HBM
            rows_vmem.at[pl.ds(t, 1), :],        # its VMEM landing slot
            sem.at[t],
        )
        cp.start()
        copies.append(cp)
    for cp in copies:
        cp.wait()

    # Fused * sqrt(d_model) on the gathered tile (single VPU mul).
    o_ref[...] = rows_vmem[...] * SCALE


# ------------------------------ wrapper -------------------------------------
def embeddings_forward(ids, table):
    """ids: (B, S) int token ids; table: (VOCAB, D_MODEL) f32 nn.Embedding.weight.

    Returns lut(ids) * sqrt(d_model) with shape (B, S, D_MODEL).
    """
    b, s = ids.shape
    t_total = b * s
    n_tiles = pl.cdiv(t_total, TILE_T)
    t_pad = n_tiles * TILE_T

    ids_flat = ids.reshape(t_total).astype(jnp.int32)
    if t_pad != t_total:
        ids_flat = jnp.pad(ids_flat, (0, t_pad - t_total))   # pad with id 0

    out = pl.pallas_call(
        embedding_gather_kernel,
        out_shape=jax.ShapeDtypeStruct((t_pad, D_MODEL), jnp.float32),
        grid_spec=pltpu.PrefetchScalarGridSpec(
            num_scalar_prefetch=1,                 # ids -> SMEM before the grid runs
            grid=(n_tiles,),
            in_specs=[
                # Embedding table stays in HBM; rows are gathered manually.
                pl.BlockSpec(memory_space=pl.ANY),
            ],
            out_specs=pl.BlockSpec((TILE_T, D_MODEL), lambda i, ids: (i, 0)),
            scratch_shapes=[
                pltpu.VMEM((TILE_T, D_MODEL), jnp.float32),
                pltpu.SemaphoreType.DMA((TILE_T,)),
            ],
        ),
        # Token tiles are independent -> shard across both TensorCores on v7x.
        compiler_params=pltpu.CompilerParams(dimension_semantics=("parallel",)),
    )(ids_flat, table)

    return out[:t_total].reshape(b, s, D_MODEL)


# ------------------------------ main ----------------------------------------
if __name__ == "__main__":
    key = jax.random.PRNGKey(0)
    k_tab, k_ids = jax.random.split(key)

    # Deterministic small inputs: embedding table + integer token ids.
    table = jax.random.normal(k_tab, (VOCAB, D_MODEL), jnp.float32)
    ids = jax.random.randint(k_ids, (B, S), 0, VOCAB, dtype=jnp.int32)

    out = embeddings_forward(ids, table)
    jax.block_until_ready(out)

    # Reference: plain-JAX embedding lookup * sqrt(d_model).
    ref = table[ids] * SCALE

    assert out.shape == (B, S, D_MODEL)
    assert bool(jnp.all(jnp.isfinite(out)))
    assert bool(jnp.allclose(out, ref, atol=1e-5, rtol=1e-5))
    print("KERNEL_OK")
</pallas_src>

<mosaic_0001>
module attributes {stable_mosaic.version = 11 : i64} {
  func.func @embedding_gather_kernel(%arg0: i32, %arg1: memref<16xi32, #tpu.memory_space<smem>>, %arg2: memref<128x32xf32, #tpu.memory_space<any>>, %arg3: memref<8x32xf32, #tpu.memory_space<vmem>>, %arg4: memref<8x32xf32, #tpu.memory_space<vmem>>, %arg5: memref<8x!tpu.dma_semaphore, #tpu.memory_space<semaphore_mem>>) attributes {dimension_semantics = [#tpu.dimension_semantics<parallel>], iteration_bounds = array<i64: 2>, scalar_prefetch = 1 : i64, scratch_operands = 2 : i64, tpu.core_type = #tpu.core_type<tc>, window_params = [{}, {transform_indices = @transform_1, window_bounds = array<i64: 8, 32>}]} {
    %c8_i32 = arith.constant 8 : i32
    %0 = arith.muli %arg0, %c8_i32 : i32
    %c0_i32 = arith.constant 0 : i32
    %1 = arith.addi %0, %c0_i32 : i32
    %2 = arith.index_cast %1 : i32 to index
    %3 = memref.load %arg1[%2] : memref<16xi32, #tpu.memory_space<smem>>
    %c0_i32_0 = arith.constant 0 : i32
    %4 = arith.maxsi %3, %c0_i32_0 : i32
    %c127_i32 = arith.constant 127 : i32
    %5 = arith.minsi %4, %c127_i32 : i32
    %c0_i32_1 = arith.constant 0 : i32
    %c0_i32_2 = arith.constant 0 : i32
    %6 = tpu.memref_slice %arg2[%5, %c0_i32_2] : memref<128x32xf32, #tpu.memory_space<any>> -> memref<1x32xf32, #tpu.memory_space<any>>
    %c0_i32_3 = arith.constant 0 : i32
    %c0_i32_4 = arith.constant 0 : i32
    %7 = tpu.memref_slice %arg4[%c0_i32_3, %c0_i32_4] : memref<8x32xf32, #tpu.memory_space<vmem>> -> memref<1x32xf32, #tpu.memory_space<vmem>>
    %8 = tpu.memref_slice %arg5[%c0_i32_1] : memref<8x!tpu.dma_semaphore, #tpu.memory_space<semaphore_mem>> -> memref<1x!tpu.dma_semaphore, #tpu.memory_space<semaphore_mem>>
    %9 = tpu.memref_squeeze %8 : memref<1x!tpu.dma_semaphore, #tpu.memory_space<semaphore_mem>> -> memref<!tpu.dma_semaphore, #tpu.memory_space<semaphore_mem>>
    tpu.enqueue_dma source(%6 : memref<1x32xf32, #tpu.memory_space<any>>) target(%7 : memref<1x32xf32, #tpu.memory_space<vmem>>) target_semaphore(%9 : memref<!tpu.dma_semaphore, #tpu.memory_space<semaphore_mem>>)
    %c1_i32 = arith.constant 1 : i32
    %10 = arith.addi %0, %c1_i32 : i32
    %11 = arith.index_cast %10 : i32 to index
    %12 = memref.load %arg1[%11] : memref<16xi32, #tpu.memory_space<smem>>
    %c0_i32_5 = arith.constant 0 : i32
    %13 = arith.maxsi %12, %c0_i32_5 : i32
    %c127_i32_6 = arith.constant 127 : i32
    %14 = arith.minsi %13, %c127_i32_6 : i32
    %c1_i32_7 = arith.constant 1 : i32
    %c0_i32_8 = arith.constant 0 : i32
    %15 = tpu.memref_slice %arg2[%14, %c0_i32_8] : memref<128x32xf32, #tpu.memory_space<any>> -> memref<1x32xf32, #tpu.memory_space<any>>
    %c1_i32_9 = arith.constant 1 : i32
    %c0_i32_10 = arith.constant 0 : i32
    %16 = tpu.memref_slice %arg4[%c1_i32_9, %c0_i32_10] : memref<8x32xf32, #tpu.memory_space<vmem>> -> memref<1x32xf32, #tpu.memory_space<vmem>>
    %17 = tpu.memref_slice %arg5[%c1_i32_7] : memref<8x!tpu.dma_semaphore, #tpu.memory_space<semaphore_mem>> -> memref<1x!tpu.dma_semaphore, #tpu.memory_space<semaphore_mem>>
    %18 = tpu.memref_squeeze %17 : memref<1x!tpu.dma_semaphore, #tpu.memory_space<semaphore_mem>> -> memref<!tpu.dma_semaphore, #tpu.memory_space<semaphore_mem>>
    tpu.enqueue_dma source(%15 : memref<1x32xf32, #tpu.memory_space<any>>) target(%16 : memref<1x32xf32, #tpu.memory_space<vmem>>) target_semaphore(%18 : memref<!tpu.dma_semaphore, #tpu.memory_space<semaphore_mem>>)
    %c2_i32 = arith.constant 2 : i32
    %19 = arith.addi %0, %c2_i32 : i32
    %20 = arith.index_cast %19 : i32 to index
    %21 = memref.load %arg1[%20] : memref<16xi32, #tpu.memory_space<smem>>
    %c0_i32_11 = arith.constant 0 : i32
    %22 = arith.maxsi %21, %c0_i32_11 : i32
    %c127_i32_12 = arith.constant 127 : i32
    %23 = arith.minsi %22, %c127_i32_12 : i32
    %c2_i32_13 = arith.constant 2 : i32
    %c0_i32_14 = arith.constant 0 : i32
    %24 = tpu.memref_slice %arg2[%23, %c0_i32_14] : memref<128x32xf32, #tpu.memory_space<any>> -> memref<1x32xf32, #tpu.memory_space<any>>
    %c2_i32_15 = arith.constant 2 : i32
    %c0_i32_16 = arith.constant 0 : i32
    %25 = tpu.memref_slice %arg4[%c2_i32_15, %c0_i32_16] : memref<8x32xf32, #tpu.memory_space<vmem>> -> memref<1x32xf32, #tpu.memory_space<vmem>>
    %26 = tpu.memref_slice %arg5[%c2_i32_13] : memref<8x!tpu.dma_semaphore, #tpu.memory_space<semaphore_mem>> -> memref<1x!tpu.dma_semaphore, #tpu.memory_space<semaphore_mem>>
    %27 = tpu.memref_squeeze %26 : memref<1x!tpu.dma_semaphore, #tpu.memory_space<semaphore_mem>> -> memref<!tpu.dma_semaphore, #tpu.memory_space<semaphore_mem>>
    tpu.enqueue_dma source(%24 : memref<1x32xf32, #tpu.memory_space<any>>) target(%25 : memref<1x32xf32, #tpu.memory_space<vmem>>) target_semaphore(%27 : memref<!tpu.dma_semaphore, #tpu.memory_space<semaphore_mem>>)
    %c3_i32 = arith.constant 3 : i32
    %28 = arith.addi %0, %c3_i32 : i32
    %29 = arith.index_cast %28 : i32 to index
    %30 = memref.load %arg1[%29] : memref<16xi32, #tpu.memory_space<smem>>
    %c0_i32_17 = arith.constant 0 : i32
    %31 = arith.maxsi %30, %c0_i32_17 : i32
    %c127_i32_18 = arith.constant 127 : i32
    %32 = arith.minsi %31, %c127_i32_18 : i32
    %c3_i32_19 = arith.constant 3 : i32
    %c0_i32_20 = arith.constant 0 : i32
    %33 = tpu.memref_slice %arg2[%32, %c0_i32_20] : memref<128x32xf32, #tpu.memory_space<any>> -> memref<1x32xf32, #tpu.memory_space<any>>
    %c3_i32_21 = arith.constant 3 : i32
    %c0_i32_22 = arith.constant 0 : i32
    %34 = tpu.memref_slice %arg4[%c3_i32_21, %c0_i32_22] : memref<8x32xf32, #tpu.memory_space<vmem>> -> memref<1x32xf32, #tpu.memory_space<vmem>>
    %35 = tpu.memref_slice %arg5[%c3_i32_19] : memref<8x!tpu.dma_semaphore, #tpu.memory_space<semaphore_mem>> -> memref<1x!tpu.dma_semaphore, #tpu.memory_space<semaphore_mem>>
    %36 = tpu.memref_squeeze %35 : memref<1x!tpu.dma_semaphore, #tpu.memory_space<semaphore_mem>> -> memref<!tpu.dma_semaphore, #tpu.memory_space<semaphore_mem>>
    tpu.enqueue_dma source(%33 : memref<1x32xf32, #tpu.memory_space<any>>) target(%34 : memref<1x32xf32, #tpu.memory_space<vmem>>) target_semaphore(%36 : memref<!tpu.dma_semaphore, #tpu.memory_space<semaphore_mem>>)
    %c4_i32 = arith.constant 4 : i32
    %37 = arith.addi %0, %c4_i32 : i32
    %38 = arith.index_cast %37 : i32 to index
    %39 = memref.load %arg1[%38] : memref<16xi32, #tpu.memory_space<smem>>
    %c0_i32_23 = arith.constant 0 : i32
    %40 = arith.maxsi %39, %c0_i32_23 : i32
    %c127_i32_24 = arith.constant 127 : i32
    %41 = arith.minsi %40, %c127_i32_24 : i32
    %c4_i32_25 = arith.constant 4 : i32
    %c0_i32_26 = arith.constant 0 : i32
    %42 = tpu.memref_slice %arg2[%41, %c0_i32_26] : memref<128x32xf32, #tpu.memory_space<any>> -> memref<1x32xf32, #tpu.memory_space<any>>
    %c4_i32_27 = arith.constant 4 : i32
    %c0_i32_28 = arith.constant 0 : i32
    %43 = tpu.memref_slice %arg4[%c4_i32_27, %c0_i32_28] : memref<8x32xf32, #tpu.memory_space<vmem>> -> memref<1x32xf32, #tpu.memory_space<vmem>>
    %44 = tpu.memref_slice %arg5[%c4_i32_25] : memref<8x!tpu.dma_semaphore, #tpu.memory_space<semaphore_mem>> -> memref<1x!tpu.dma_semaphore, #tpu.memory_space<semaphore_mem>>
    %45 = tpu.memref_squeeze %44 : memref<1x!tpu.dma_semaphore, #tpu.memory_space<semaphore_mem>> -> memref<!tpu.dma_semaphore, #tpu.memory_space<semaphore_mem>>
    tpu.enqueue_dma source(%42 : memref<1x32xf32, #tpu.memory_space<any>>) target(%43 : memref<1x32xf32, #tpu.memory_space<vmem>>) target_semaphore(%45 : memref<!tpu.dma_semaphore, #tpu.memory_space<semaphore_mem>>)
    %c5_i32 = arith.constant 5 : i32
    %46 = arith.addi %0, %c5_i32 : i32
    %47 = arith.index_cast %46 : i32 to index
    %48 = memref.load %arg1[%47] : memref<16xi32, #tpu.memory_space<smem>>
    %c0_i32_29 = arith.constant 0 : i32
    %49 = arith.maxsi %48, %c0_i32_29 : i32
    %c127_i32_30 = arith.constant 127 : i32
    %50 = arith.minsi %49, %c127_i32_30 : i32
    %c5_i32_31 = arith.constant 5 : i32
    %c0_i32_32 = arith.constant 0 : i32
    %51 = tpu.memref_slice %arg2[%50, %c0_i32_32] : memref<128x32xf32, #tpu.memory_space<any>> -> memref<1x32xf32, #tpu.memory_space<any>>
    %c5_i32_33 = arith.constant 5 : i32
    %c0_i32_34 = arith.constant 0 : i32
    %52 = tpu.memref_slice %arg4[%c5_i32_33, %c0_i32_34] : memref<8x32xf32, #tpu.memory_space<vmem>> -> memref<1x32xf32, #tpu.memory_space<vmem>>
    %53 = tpu.memref_slice %arg5[%c5_i32_31] : memref<8x!tpu.dma_semaphore, #tpu.memory_space<semaphore_mem>> -> memref<1x!tpu.dma_semaphore, #tpu.memory_space<semaphore_mem>>
    %54 = tpu.memref_squeeze %53 : memref<1x!tpu.dma_semaphore, #tpu.memory_space<semaphore_mem>> -> memref<!tpu.dma_semaphore, #tpu.memory_space<semaphore_mem>>
    tpu.enqueue_dma source(%51 : memref<1x32xf32, #tpu.memory_space<any>>) target(%52 : memref<1x32xf32, #tpu.memory_space<vmem>>) target_semaphore(%54 : memref<!tpu.dma_semaphore, #tpu.memory_space<semaphore_mem>>)
    %c6_i32 = arith.constant 6 : i32
    %55 = arith.addi %0, %c6_i32 : i32
    %56 = arith.index_cast %55 : i32 to index
    %57 = memref.load %arg1[%56] : memref<16xi32, #tpu.memory_space<smem>>
    %c0_i32_35 = arith.constant 0 : i32
    %58 = arith.maxsi %57, %c0_i32_35 : i32
    %c127_i32_36 = arith.constant 127 : i32
    %59 = arith.minsi %58, %c127_i32_36 : i32
    %c6_i32_37 = arith.constant 6 : i32
    %c0_i32_38 = arith.constant 0 : i32
    %60 = tpu.memref_slice %arg2[%59, %c0_i32_38] : memref<128x32xf32, #tpu.memory_space<any>> -> memref<1x32xf32, #tpu.memory_space<any>>
    %c6_i32_39 = arith.constant 6 : i32
    %c0_i32_40 = arith.constant 0 : i32
    %61 = tpu.memref_slice %arg4[%c6_i32_39, %c0_i32_40] : memref<8x32xf32, #tpu.memory_space<vmem>> -> memref<1x32xf32, #tpu.memory_space<vmem>>
    %62 = tpu.memref_slice %arg5[%c6_i32_37] : memref<8x!tpu.dma_semaphore, #tpu.memory_space<semaphore_mem>> -> memref<1x!tpu.dma_semaphore, #tpu.memory_space<semaphore_mem>>
    %63 = tpu.memref_squeeze %62 : memref<1x!tpu.dma_semaphore, #tpu.memory_space<semaphore_mem>> -> memref<!tpu.dma_semaphore, #tpu.memory_space<semaphore_mem>>
    tpu.enqueue_dma source(%60 : memref<1x32xf32, #tpu.memory_space<any>>) target(%61 : memref<1x32xf32, #tpu.memory_space<vmem>>) target_semaphore(%63 : memref<!tpu.dma_semaphore, #tpu.memory_space<semaphore_mem>>)
    %c7_i32 = arith.constant 7 : i32
    %64 = arith.addi %0, %c7_i32 : i32
    %65 = arith.index_cast %64 : i32 to index
    %66 = memref.load %arg1[%65] : memref<16xi32, #tpu.memory_space<smem>>
    %c0_i32_41 = arith.constant 0 : i32
    %67 = arith.maxsi %66, %c0_i32_41 : i32
    %c127_i32_42 = arith.constant 127 : i32
    %68 = arith.minsi %67, %c127_i32_42 : i32
    %c7_i32_43 = arith.constant 7 : i32
    %c0_i32_44 = arith.constant 0 : i32
    %69 = tpu.memref_slice %arg2[%68, %c0_i32_44] : memref<128x32xf32, #tpu.memory_space<any>> -> memref<1x32xf32, #tpu.memory_space<any>>
    %c7_i32_45 = arith.constant 7 : i32
    %c0_i32_46 = arith.constant 0 : i32
    %70 = tpu.memref_slice %arg4[%c7_i32_45, %c0_i32_46] : memref<8x32xf32, #tpu.memory_space<vmem>> -> memref<1x32xf32, #tpu.memory_space<vmem>>
    %71 = tpu.memref_slice %arg5[%c7_i32_43] : memref<8x!tpu.dma_semaphore, #tpu.memory_space<semaphore_mem>> -> memref<1x!tpu.dma_semaphore, #tpu.memory_space<semaphore_mem>>
    %72 = tpu.memref_squeeze %71 : memref<1x!tpu.dma_semaphore, #tpu.memory_space<semaphore_mem>> -> memref<!tpu.dma_semaphore, #tpu.memory_space<semaphore_mem>>
    tpu.enqueue_dma source(%69 : memref<1x32xf32, #tpu.memory_space<any>>) target(%70 : memref<1x32xf32, #tpu.memory_space<vmem>>) target_semaphore(%72 : memref<!tpu.dma_semaphore, #tpu.memory_space<semaphore_mem>>)
    %c0_i32_47 = arith.constant 0 : i32
    %c0_i32_48 = arith.constant 0 : i32
    %73 = tpu.memref_slice %arg2[%5, %c0_i32_48] : memref<128x32xf32, #tpu.memory_space<any>> -> memref<1x32xf32, #tpu.memory_space<any>>
    %c0_i32_49 = arith.constant 0 : i32
    %c0_i32_50 = arith.constant 0 : i32
    %74 = tpu.memref_slice %arg4[%c0_i32_49, %c0_i32_50] : memref<8x32xf32, #tpu.memory_space<vmem>> -> memref<1x32xf32, #tpu.memory_space<vmem>>
    %75 = tpu.memref_slice %arg5[%c0_i32_47] : memref<8x!tpu.dma_semaphore, #tpu.memory_space<semaphore_mem>> -> memref<1x!tpu.dma_semaphore, #tpu.memory_space<semaphore_mem>>
    %76 = tpu.memref_squeeze %75 : memref<1x!tpu.dma_semaphore, #tpu.memory_space<semaphore_mem>> -> memref<!tpu.dma_semaphore, #tpu.memory_space<semaphore_mem>>
    tpu.wait_dma2 semaphore(%76 : memref<!tpu.dma_semaphore, #tpu.memory_space<semaphore_mem>>) src(%73 : memref<1x32xf32, #tpu.memory_space<any>>) dst(%74 : memref<1x32xf32, #tpu.memory_space<vmem>>)
    %c1_i32_51 = arith.constant 1 : i32
    %c0_i32_52 = arith.constant 0 : i32
    %77 = tpu.memref_slice %arg2[%14, %c0_i32_52] : memref<128x32xf32, #tpu.memory_space<any>> -> memref<1x32xf32, #tpu.memory_space<any>>
    %c1_i32_53 = arith.constant 1 : i32
    %c0_i32_54 = arith.constant 0 : i32
    %78 = tpu.memref_slice %arg4[%c1_i32_53, %c0_i32_54] : memref<8x32xf32, #tpu.memory_space<vmem>> -> memref<1x32xf32, #tpu.memory_space<vmem>>
    %79 = tpu.memref_slice %arg5[%c1_i32_51] : memref<8x!tpu.dma_semaphore, #tpu.memory_space<semaphore_mem>> -> memref<1x!tpu.dma_semaphore, #tpu.memory_space<semaphore_mem>>
    %80 = tpu.memref_squeeze %79 : memref<1x!tpu.dma_semaphore, #tpu.memory_space<semaphore_mem>> -> memref<!tpu.dma_semaphore, #tpu.memory_space<semaphore_mem>>
    tpu.wait_dma2 semaphore(%80 : memref<!tpu.dma_semaphore, #tpu.memory_space<semaphore_mem>>) src(%77 : memref<1x32xf32, #tpu.memory_space<any>>) dst(%78 : memref<1x32xf32, #tpu.memory_space<vmem>>)
    %c2_i32_55 = arith.constant 2 : i32
    %c0_i32_56 = arith.constant 0 : i32
    %81 = tpu.memref_slice %arg2[%23, %c0_i32_56] : memref<128x32xf32, #tpu.memory_space<any>> -> memref<1x32xf32, #tpu.memory_space<any>>
    %c2_i32_57 = arith.constant 2 : i32
    %c0_i32_58 = arith.constant 0 : i32
    %82 = tpu.memref_slice %arg4[%c2_i32_57, %c0_i32_58] : memref<8x32xf32, #tpu.memory_space<vmem>> -> memref<1x32xf32, #tpu.memory_space<vmem>>
    %83 = tpu.memref_slice %arg5[%c2_i32_55] : memref<8x!tpu.dma_semaphore, #tpu.memory_space<semaphore_mem>> -> memref<1x!tpu.dma_semaphore, #tpu.memory_space<semaphore_mem>>
    %84 = tpu.memref_squeeze %83 : memref<1x!tpu.dma_semaphore, #tpu.memory_space<semaphore_mem>> -> memref<!tpu.dma_semaphore, #tpu.memory_space<semaphore_mem>>
    tpu.wait_dma2 semaphore(%84 : memref<!tpu.dma_semaphore, #tpu.memory_space<semaphore_mem>>) src(%81 : memref<1x32xf32, #tpu.memory_space<any>>) dst(%82 : memref<1x32xf32, #tpu.memory_space<vmem>>)
    %c3_i32_59 = arith.constant 3 : i32
    %c0_i32_60 = arith.constant 0 : i32
    %85 = tpu.memref_slice %arg2[%32, %c0_i32_60] : memref<128x32xf32, #tpu.memory_space<any>> -> memref<1x32xf32, #tpu.memory_space<any>>
    %c3_i32_61 = arith.constant 3 : i32
    %c0_i32_62 = arith.constant 0 : i32
    %86 = tpu.memref_slice %arg4[%c3_i32_61, %c0_i32_62] : memref<8x32xf32, #tpu.memory_space<vmem>> -> memref<1x32xf32, #tpu.memory_space<vmem>>
    %87 = tpu.memref_slice %arg5[%c3_i32_59] : memref<8x!tpu.dma_semaphore, #tpu.memory_space<semaphore_mem>> -> memref<1x!tpu.dma_semaphore, #tpu.memory_space<semaphore_mem>>
    %88 = tpu.memref_squeeze %87 : memref<1x!tpu.dma_semaphore, #tpu.memory_space<semaphore_mem>> -> memref<!tpu.dma_semaphore, #tpu.memory_space<semaphore_mem>>
    tpu.wait_dma2 semaphore(%88 : memref<!tpu.dma_semaphore, #tpu.memory_space<semaphore_mem>>) src(%85 : memref<1x32xf32, #tpu.memory_space<any>>) dst(%86 : memref<1x32xf32, #tpu.memory_space<vmem>>)
    %c4_i32_63 = arith.constant 4 : i32
    %c0_i32_64 = arith.constant 0 : i32
    %89 = tpu.memref_slice %arg2[%41, %c0_i32_64] : memref<128x32xf32, #tpu.memory_space<any>> -> memref<1x32xf32, #tpu.memory_space<any>>
    %c4_i32_65 = arith.constant 4 : i32
    %c0_i32_66 = arith.constant 0 : i32
    %90 = tpu.memref_slice %arg4[%c4_i32_65, %c0_i32_66] : memref<8x32xf32, #tpu.memory_space<vmem>> -> memref<1x32xf32, #tpu.memory_space<vmem>>
    %91 = tpu.memref_slice %arg5[%c4_i32_63] : memref<8x!tpu.dma_semaphore, #tpu.memory_space<semaphore_mem>> -> memref<1x!tpu.dma_semaphore, #tpu.memory_space<semaphore_mem>>
    %92 = tpu.memref_squeeze %91 : memref<1x!tpu.dma_semaphore, #tpu.memory_space<semaphore_mem>> -> memref<!tpu.dma_semaphore, #tpu.memory_space<semaphore_mem>>
    tpu.wait_dma2 semaphore(%92 : memref<!tpu.dma_semaphore, #tpu.memory_space<semaphore_mem>>) src(%89 : memref<1x32xf32, #tpu.memory_space<any>>) dst(%90 : memref<1x32xf32, #tpu.memory_space<vmem>>)
    %c5_i32_67 = arith.constant 5 : i32
    %c0_i32_68 = arith.constant 0 : i32
    %93 = tpu.memref_slice %arg2[%50, %c0_i32_68] : memref<128x32xf32, #tpu.memory_space<any>> -> memref<1x32xf32, #tpu.memory_space<any>>
    %c5_i32_69 = arith.constant 5 : i32
    %c0_i32_70 = arith.constant 0 : i32
    %94 = tpu.memref_slice %arg4[%c5_i32_69, %c0_i32_70] : memref<8x32xf32, #tpu.memory_space<vmem>> -> memref<1x32xf32, #tpu.memory_space<vmem>>
    %95 = tpu.memref_slice %arg5[%c5_i32_67] : memref<8x!tpu.dma_semaphore, #tpu.memory_space<semaphore_mem>> -> memref<1x!tpu.dma_semaphore, #tpu.memory_space<semaphore_mem>>
    %96 = tpu.memref_squeeze %95 : memref<1x!tpu.dma_semaphore, #tpu.memory_space<semaphore_mem>> -> memref<!tpu.dma_semaphore, #tpu.memory_space<semaphore_mem>>
    tpu.wait_dma2 semaphore(%96 : memref<!tpu.dma_semaphore, #tpu.memory_space<semaphore_mem>>) src(%93 : memref<1x32xf32, #tpu.memory_space<any>>) dst(%94 : memref<1x32xf32, #tpu.memory_space<vmem>>)
    %c6_i32_71 = arith.constant 6 : i32
    %c0_i32_72 = arith.constant 0 : i32
    %97 = tpu.memref_slice %arg2[%59, %c0_i32_72] : memref<128x32xf32, #tpu.memory_space<any>> -> memref<1x32xf32, #tpu.memory_space<any>>
    %c6_i32_73 = arith.constant 6 : i32
    %c0_i32_74 = arith.constant 0 : i32
    %98 = tpu.memref_slice %arg4[%c6_i32_73, %c0_i32_74] : memref<8x32xf32, #tpu.memory_space<vmem>> -> memref<1x32xf32, #tpu.memory_space<vmem>>
    %99 = tpu.memref_slice %arg5[%c6_i32_71] : memref<8x!tpu.dma_semaphore, #tpu.memory_space<semaphore_mem>> -> memref<1x!tpu.dma_semaphore, #tpu.memory_space<semaphore_mem>>
    %100 = tpu.memref_squeeze %99 : memref<1x!tpu.dma_semaphore, #tpu.memory_space<semaphore_mem>> -> memref<!tpu.dma_semaphore, #tpu.memory_space<semaphore_mem>>
    tpu.wait_dma2 semaphore(%100 : memref<!tpu.dma_semaphore, #tpu.memory_space<semaphore_mem>>) src(%97 : memref<1x32xf32, #tpu.memory_space<any>>) dst(%98 : memref<1x32xf32, #tpu.memory_space<vmem>>)
    %c7_i32_75 = arith.constant 7 : i32
    %c0_i32_76 = arith.constant 0 : i32
    %101 = tpu.memref_slice %arg2[%68, %c0_i32_76] : memref<128x32xf32, #tpu.memory_space<any>> -> memref<1x32xf32, #tpu.memory_space<any>>
    %c7_i32_77 = arith.constant 7 : i32
    %c0_i32_78 = arith.constant 0 : i32
    %102 = tpu.memref_slice %arg4[%c7_i32_77, %c0_i32_78] : memref<8x32xf32, #tpu.memory_space<vmem>> -> memref<1x32xf32, #tpu.memory_space<vmem>>
    %103 = tpu.memref_slice %arg5[%c7_i32_75] : memref<8x!tpu.dma_semaphore, #tpu.memory_space<semaphore_mem>> -> memref<1x!tpu.dma_semaphore, #tpu.memory_space<semaphore_mem>>
    %104 = tpu.memref_squeeze %103 : memref<1x!tpu.dma_semaphore, #tpu.memory_space<semaphore_mem>> -> memref<!tpu.dma_semaphore, #tpu.memory_space<semaphore_mem>>
    tpu.wait_dma2 semaphore(%104 : memref<!tpu.dma_semaphore, #tpu.memory_space<semaphore_mem>>) src(%101 : memref<1x32xf32, #tpu.memory_space<any>>) dst(%102 : memref<1x32xf32, #tpu.memory_space<vmem>>)
    %c0 = arith.constant 0 : index
    %c0_79 = arith.constant 0 : index
    %105 = vector.load %arg4[%c0, %c0_79] : memref<8x32xf32, #tpu.memory_space<vmem>>, vector<8x32xf32>
    %cst = arith.constant 5.65685415 : f32
    %106 = vector.broadcast %cst : f32 to vector<8x32xf32>
    %107 = arith.mulf %105, %106 : vector<8x32xf32>
    %c0_80 = arith.constant 0 : index
    %c0_81 = arith.constant 0 : index
    %108 = vector.load %arg3[%c0_80, %c0_81] : memref<8x32xf32, #tpu.memory_space<vmem>>, vector<8x32xf32>
    tpu.vector_store %arg3[%c0_80, %c0_81], %107 {strides = array<i32>} : memref<8x32xf32, #tpu.memory_space<vmem>>, vector<8x32xf32>,
    return
  }
  func.func @transform_1(%arg0: i32, %arg1: memref<16xi32, #tpu.memory_space<smem>>) -> (i32, i32) {
    %c0_i32 = arith.constant 0 : i32
    %c0_i32_0 = arith.constant 0 : i32
    return %arg0, %c0_i32 : i32, i32
  }
}

</mosaic_0001>

<llo_original>
// kernel: tpu_custom_call.1
$region0: #{tpu_custom_call.1}
  #allocation0 [shape = 'u32[]', space=smem, size = 0x4, offset = 0x4, fixed_abs, tag = 'smem constant byte address 0x4 - core index']
  #allocation1 [shape = 'u32[72,128]{1,0:T(1,128)}', space=vmem, size = 0x9000, scoped, tag = 'internal scratch']
  #allocation2 [shape = 'f32[8,32]{1,0:T(8,128)}', space=vmem, size = 0x1000, scoped, tag = 'scratch operand']
  #allocation3 [shape = 's32[8]{0}', space=sflag, size = 0x20, scoped, tag = 'scratch operand']
  #allocation4 [shape = 's32[1]{0}', space=sflag, size = 0x4, scoped, tag = 'scoped memory for tpu_custom_call.1']
  #allocation5 [shape = 'u8[512]{0}', space=smem, size = 0x200, scoped, tag = 'prefetched SMEM operand 0']
  #allocation8 [shape = 's32[]', space=sflag, size = 0x4, offset = 0, fixed_abs, tag = 'sflag constant byte address 0x0 - dummy sync flag']
  #allocation9 [shape = 's32[]', space=sflag, size = 0x4, offset = 0, fixed_abs, tag = 'sflag constant byte address 0x0 - dummy sync flag']
  #allocation10 [shape = 's32[]', space=sflag, size = 0x4, offset = 0, fixed_abs, tag = 'sflag constant byte address 0x0 - dummy sync flag']
  #allocation11 [shape = 's32[]', space=sflag, size = 0x4, offset = 0, fixed_abs, tag = 'sflag constant byte address 0x0 - dummy sync flag']
  #allocation12 [shape = 's32[]', space=sflag, size = 0x4, offset = 0, fixed_abs, tag = 'sflag constant byte address 0x0 - dummy sync flag']
  #allocation13 [shape = 's32[]', space=sflag, size = 0x4, offset = 0, fixed_abs, tag = 'sflag constant byte address 0x0 - dummy sync flag']
  #allocation14 [shape = 's32[]', space=sflag, size = 0x4, offset = 0, fixed_abs, tag = 'sflag constant byte address 0x0 - dummy sync flag']
  #allocation15 [shape = 's32[]', space=sflag, size = 0x4, offset = 0, fixed_abs, tag = 'sflag constant byte address 0x0 - dummy sync flag']
  %s0 = inlined_call_operand.vmem [shape: s32[16], index: 0, kind: input, shape index: {}]
  %s1 = inlined_call_operand.vmem [shape: f32[128,32], index: 1, kind: input, shape index: {}]
  %s2 = inlined_call_operand.hbm [shape: f32[16,32], index: 2, kind: output, shape index: {}]
  %s3 = sld [smem:[#allocation0]]
  $region265: #{tpu_custom_call.1} parent=0
    _
  %s5 = ssub.s32 1, %s3
  %s6 = scalar_select 0, %s5, %s3
  %s8 = sshll.u32 %s0, 4
  %s9 = int_to_ptr.vmem [resolvable:$true] %s8
  %11 = dma.vmem_to_smem %s9, 16, [#allocation5], [#allocation4]
  %13 = dma.done [#allocation4], 16
  %14 = sfence
  $region1: #{tpu_custom_call.1} parent=0
    #allocation6 [shape = 'u8[8192]{0}', space=vmem, size = 0x2000, scoped, tag = 'output window, operand 0']
    #allocation7 [shape = 's32[2]{0}', space=sflag, size = 0x8, scoped, tag = 'scoped memory for tpu_custom_call.1']
    %15 = vsyncpa [#allocation7], 0
    %s16 = scalar_lea.sflag [#allocation7], 1
    %17 = vsyncpa %s16, 0
    loop: start=0, step=1, limit=3
    $region2: #{tpu_custom_call.1} parent=1 // loop_pre_header
      _
    $region3: #{tpu_custom_call.1} parent=1 // loop_header
      %s19 = sphi 0, %s23
      %p20 = scmp.ge.s32.totalorder %s19, 3
      %s28 = sphi 0, %s30
      %s31 = sphi 0, %s28
      %s41 = sphi 0, %s31
    $region4: #{tpu_custom_call.1} parent=1 // loop_header_branch
      %22 = sbr.rel (%p20) target = $region8
    $region5: #{tpu_custom_call.1} parent=1 // loop_body
      %s24 = ssub.s32 %s19, 1
      %s25 = sadd.s32 %s19, 1
      %s26 = ssub.s32 %s19, %s25
      %p27 = scmp.eq.s32.totalorder %s26, 0
      %s29 = sadd.s32 %s28, 1
      %s30 = scalar_select %p27, %s28, %s29
      %p32 = pneg %p27
      %p33 = scmp.eq.s32.totalorder %s19, 1
      %p34 = por %p32, %p33
      %p35 = scmp.ne.s32.totalorder %s28, %s31
      %p36 = scmp.eq.s32.totalorder %s19, 0
      %p37 = por %p35, %p36
      %p38 = scmp.ne.s32.totalorder %s28, %s31
      %p39 = scmp.eq.s32.totalorder %s24, 1
      %p40 = por %p38, %p39
      %p42 = scmp.ne.s32.totalorder %s31, %s41
      %p43 = scmp.eq.s32.totalorder %s24, 0
      %p44 = por %p42, %p43
      %p45 = scmp.lt.s32.totalorder %s19, 2
      // Predicated region
      $region9: #{tpu_custom_call.1} parent=5 // pred_check
        %p46 = pneg %p45
      $region10: #{tpu_custom_call.1} parent=5 // pred_check_branch
        %48 = sbr.rel (%p46) target = $region12
      $region11: #{tpu_custom_call.1} parent=5 // pred_region
        %p49 = pneg %p37
        %p50 = pneg %p34
        %s51 = sand.u32 %s28, 1
        %s52 = scalar_lea.sflag [#allocation7], %s51
        %s53 = sand.u32 %s28, 1
        %s54 = smul.addr %s53, 8
        %s55 = scalar_lea.vmem [#allocation6], %s54
        %s56 = smul.u32 %s19, 8
        %s57 = sld [smem:[#allocation5 + %s56]]
        %p58 = scmp.gt.s32.totalorder %s57, 0
        %s59 = scalar_select %p58, %s57, 0
        %p60 = scmp.lt.s32.totalorder %s59, 127
        %s61 = scalar_select %p60, %s59, 127
        %s62 = scalar_lea.vmem %s1, %s61
        // Predicated region
        $region13: #{tpu_custom_call.1} parent=11 // pred_check
          _
        $region14: #{tpu_custom_call.1} parent=11 // pred_check_branch
          %64 = sbr.rel target = $region16
        $region15: #{tpu_custom_call.1} parent=11 // pred_region
          // Predicated region
          $region28: #{tpu_custom_call.1} parent=15 // pred_check
            _
          $region29: #{tpu_custom_call.1} parent=15 // pred_check_branch
            %80 = sbr.rel (0) target = $region31
          $region30: #{tpu_custom_call.1} parent=15 // pred_region
            %s82 = ssub.s32 2, 1
            loop: start=0, step=1, limit=1
            $region32: #{tpu_custom_call.1} parent=30 // loop_pre_header
              _
            $region33: #{tpu_custom_call.1} parent=30 // loop_header
              %s84 = sphi 0, %s88
              %p85 = scmp.ge.s32.totalorder %s84, 1
              %s89 = sphi %s62, %s62
              %s90 = sphi [#allocation2], [#allocation2]
            $region34: #{tpu_custom_call.1} parent=30 // loop_header_branch
              %87 = sbr.rel (%p85) target = $region38
            $region35: #{tpu_custom_call.1} parent=30 // loop_body
              %v91 = vld [vmem:[%s89] sm:%s82]
              %92 = vst [vmem:[%s90] sm:%s82] %v91
            $region36: #{tpu_custom_call.1} parent=30 // loop_footer
              %s88 = sadd.s32 1, %s84
            $region37: #{tpu_custom_call.1} parent=30 // loop_footer_branch
              %83 = sbr.rel target = $region33
            $region38: #{tpu_custom_call.1} parent=30 // loop_exit
              _
          $region31: #{tpu_custom_call.1} parent=15 // pred_fallthru
            _
        $region16: #{tpu_custom_call.1} parent=11 // pred_fallthru
          _
        // Predicated region
        $region17: #{tpu_custom_call.1} parent=11 // pred_check
          _
        $region18: #{tpu_custom_call.1} parent=11 // pred_check_branch
          %66 = sbr.rel (0) target = $region20
        $region19: #{tpu_custom_call.1} parent=11 // pred_region
          %s68 = ssub.s32 2, 1
          loop: start=0, step=1, limit=1
          $region21: #{tpu_custom_call.1} parent=19 // loop_pre_header
            _
          $region22: #{tpu_custom_call.1} parent=19 // loop_header
            %s70 = sphi 0, %s74
            %p71 = scmp.ge.s32.totalorder %s70, 1
            %s75 = sphi %s62, %s62
            %s76 = sphi [#allocation2], [#allocation2]
          $region23: #{tpu_custom_call.1} parent=19 // loop_header_branch
            %73 = sbr.rel (%p71) target = $region27
          $region24: #{tpu_custom_call.1} parent=19 // loop_body
            %v77 = vld [vmem:[%s75] sm:%s68]
            %78 = vst [vmem:[%s76] sm:%s68] %v77
          $region25: #{tpu_custom_call.1} parent=19 // loop_footer
            %s74 = sadd.s32 1, %s70
          $region26: #{tpu_custom_call.1} parent=19 // loop_footer_branch
            %69 = sbr.rel target = $region22
          $region27: #{tpu_custom_call.1} parent=19 // loop_exit
            _
        $region20: #{tpu_custom_call.1} parent=11 // pred_fallthru
          _
        // Predicated region
        $region39: #{tpu_custom_call.1} parent=11 // pred_check
          _
        $region40: #{tpu_custom_call.1} parent=11 // pred_check_branch
          %95 = sbr.rel (0) target = $region42
        $region41: #{tpu_custom_call.1} parent=11 // pred_region
          %96 = vsyncadd [#allocation3], 16
        $region42: #{tpu_custom_call.1} parent=11 // pred_fallthru
          _
        %s97 = sadd.s32 %s56, 1
        %s98 = sld [smem:[#allocation5 + %s97]]
        %p99 = scmp.gt.s32.totalorder %s98, 0
        %s100 = scalar_select %p99, %s98, 0
        %p101 = scmp.lt.s32.totalorder %s100, 127
        %s102 = scalar_select %p101, %s100, 127
        %s103 = scalar_lea.vmem %s1, %s102
        %s104 = scalar_lea.vmem [#allocation2], 1
        %s105 = scalar_lea.sflag [#allocation3], 1
        // Predicated region
        $region43: #{tpu_custom_call.1} parent=11 // pred_check
          _
        $region44: #{tpu_custom_call.1} parent=11 // pred_check_branch
          %107 = sbr.rel target = $region46
        $region45: #{tpu_custom_call.1} parent=11 // pred_region
          // Predicated region
          $region58: #{tpu_custom_call.1} parent=45 // pred_check
            _
          $region59: #{tpu_custom_call.1} parent=45 // pred_check_branch
            %123 = sbr.rel (0) target = $region61
          $region60: #{tpu_custom_call.1} parent=45 // pred_region
            %s125 = ssub.s32 2, 1
            loop: start=0, step=1, limit=1
            $region62: #{tpu_custom_call.1} parent=60 // loop_pre_header
              _
            $region63: #{tpu_custom_call.1} parent=60 // loop_header
              %s127 = sphi 0, %s131
              %p128 = scmp.ge.s32.totalorder %s127, 1
              %s132 = sphi %s103, %s103
              %s133 = sphi %s104, %s104
            $region64: #{tpu_custom_call.1} parent=60 // loop_header_branch
              %130 = sbr.rel (%p128) target = $region68
            $region65: #{tpu_custom_call.1} parent=60 // loop_body
              %v134 = vld [vmem:[%s132] sm:%s125]
              %135 = vst [vmem:[%s133] sm:%s125] %v134
            $region66: #{tpu_custom_call.1} parent=60 // loop_footer
              %s131 = sadd.s32 1, %s127
            $region67: #{tpu_custom_call.1} parent=60 // loop_footer_branch
              %126 = sbr.rel target = $region63
            $region68: #{tpu_custom_call.1} parent=60 // loop_exit
              _
          $region61: #{tpu_custom_call.1} parent=45 // pred_fallthru
            _
        $region46: #{tpu_custom_call.1} parent=11 // pred_fallthru
          _
        // Predicated region
        $region47: #{tpu_custom_call.1} parent=11 // pred_check
          _
        $region48: #{tpu_custom_call.1} parent=11 // pred_check_branch
          %109 = sbr.rel (0) target = $region50
        $region49: #{tpu_custom_call.1} parent=11 // pred_region
          %s111 = ssub.s32 2, 1
          loop: start=0, step=1, limit=1
          $region51: #{tpu_custom_call.1} parent=49 // loop_pre_header
            _
          $region52: #{tpu_custom_call.1} parent=49 // loop_header
            %s113 = sphi 0, %s117
            %p114 = scmp.ge.s32.totalorder %s113, 1
            %s118 = sphi %s103, %s103
            %s119 = sphi %s104, %s104
          $region53: #{tpu_custom_call.1} parent=49 // loop_header_branch
            %116 = sbr.rel (%p114) target = $region57
          $region54: #{tpu_custom_call.1} parent=49 // loop_body
            %v120 = vld [vmem:[%s118] sm:%s111]
            %121 = vst [vmem:[%s119] sm:%s111] %v120
          $region55: #{tpu_custom_call.1} parent=49 // loop_footer
            %s117 = sadd.s32 1, %s113
          $region56: #{tpu_custom_call.1} parent=49 // loop_footer_branch
            %112 = sbr.rel target = $region52
          $region57: #{tpu_custom_call.1} parent=49 // loop_exit
            _
        $region50: #{tpu_custom_call.1} parent=11 // pred_fallthru
          _
        // Predicated region
        $region69: #{tpu_custom_call.1} parent=11 // pred_check
          _
        $region70: #{tpu_custom_call.1} parent=11 // pred_check_branch
          %138 = sbr.rel (0) target = $region72
        $region71: #{tpu_custom_call.1} parent=11 // pred_region
          %139 = vsyncadd %s105, 16
        $region72: #{tpu_custom_call.1} parent=11 // pred_fallthru
          _
        %s140 = sadd.s32 %s56, 2
        %s141 = sld [smem:[#allocation5 + %s140]]
        %p142 = scmp.gt.s32.totalorder %s141, 0
        %s143 = scalar_select %p142, %s141, 0
        %p144 = scmp.lt.s32.totalorder %s143, 127
        %s145 = scalar_select %p144, %s143, 127
        %s146 = scalar_lea.vmem %s1, %s145
        %s147 = scalar_lea.vmem [#allocation2], 2
        %s148 = scalar_lea.sflag [#allocation3], 2
        // Predicated region
        $region73: #{tpu_custom_call.1} parent=11 // pred_check
          _
        $region74: #{tpu_custom_call.1} parent=11 // pred_check_branch
          %150 = sbr.rel target = $region76
        $region75: #{tpu_custom_call.1} parent=11 // pred_region
          // Predicated region
          $region88: #{tpu_custom_call.1} parent=75 // pred_check
            _
          $region89: #{tpu_custom_call.1} parent=75 // pred_check_branch
            %166 = sbr.rel (0) target = $region91
          $region90: #{tpu_custom_call.1} parent=75 // pred_region
            %s168 = ssub.s32 2, 1
            loop: start=0, step=1, limit=1
            $region92: #{tpu_custom_call.1} parent=90 // loop_pre_header
              _
            $region93: #{tpu_custom_call.1} parent=90 // loop_header
              %s170 = sphi 0, %s174
              %p171 = scmp.ge.s32.totalorder %s170, 1
              %s175 = sphi %s146, %s146
              %s176 = sphi %s147, %s147
            $region94: #{tpu_custom_call.1} parent=90 // loop_header_branch
              %173 = sbr.rel (%p171) target = $region98
            $region95: #{tpu_custom_call.1} parent=90 // loop_body
              %v177 = vld [vmem:[%s175] sm:%s168]
              %178 = vst [vmem:[%s176] sm:%s168] %v177
            $region96: #{tpu_custom_call.1} parent=90 // loop_footer
              %s174 = sadd.s32 1, %s170
            $region97: #{tpu_custom_call.1} parent=90 // loop_footer_branch
              %169 = sbr.rel target = $region93
            $region98: #{tpu_custom_call.1} parent=90 // loop_exit
              _
          $region91: #{tpu_custom_call.1} parent=75 // pred_fallthru
            _
        $region76: #{tpu_custom_call.1} parent=11 // pred_fallthru
          _
        // Predicated region
        $region77: #{tpu_custom_call.1} parent=11 // pred_check
          _
        $region78: #{tpu_custom_call.1} parent=11 // pred_check_branch
          %152 = sbr.rel (0) target = $region80
        $region79: #{tpu_custom_call.1} parent=11 // pred_region
          %s154 = ssub.s32 2, 1
          loop: start=0, step=1, limit=1
          $region81: #{tpu_custom_call.1} parent=79 // loop_pre_header
            _
          $region82: #{tpu_custom_call.1} parent=79 // loop_header
            %s156 = sphi 0, %s160
            %p157 = scmp.ge.s32.totalorder %s156, 1
            %s161 = sphi %s146, %s146
            %s162 = sphi %s147, %s147
          $region83: #{tpu_custom_call.1} parent=79 // loop_header_branch
            %159 = sbr.rel (%p157) target = $region87
          $region84: #{tpu_custom_call.1} parent=79 // loop_body
            %v163 = vld [vmem:[%s161] sm:%s154]
            %164 = vst [vmem:[%s162] sm:%s154] %v163
          $region85: #{tpu_custom_call.1} parent=79 // loop_footer
            %s160 = sadd.s32 1, %s156
          $region86: #{tpu_custom_call.1} parent=79 // loop_footer_branch
            %155 = sbr.rel target = $region82
          $region87: #{tpu_custom_call.1} parent=79 // loop_exit
            _
        $region80: #{tpu_custom_call.1} parent=11 // pred_fallthru
          _
        // Predicated region
        $region99: #{tpu_custom_call.1} parent=11 // pred_check
          _
        $region100: #{tpu_custom_call.1} parent=11 // pred_check_branch
          %181 = sbr.rel (0) target = $region102
        $region101: #{tpu_custom_call.1} parent=11 // pred_region
          %182 = vsyncadd %s148, 16
        $region102: #{tpu_custom_call.1} parent=11 // pred_fallthru
          _
        %s183 = sadd.s32 %s56, 3
        %s184 = sld [smem:[#allocation5 + %s183]]
        %p185 = scmp.gt.s32.totalorder %s184, 0
        %s186 = scalar_select %p185, %s184, 0
        %p187 = scmp.lt.s32.totalorder %s186, 127
        %s188 = scalar_select %p187, %s186, 127
        %s189 = scalar_lea.vmem %s1, %s188
        %s190 = scalar_lea.vmem [#allocation2], 3
        %s191 = scalar_lea.sflag [#allocation3], 3
        // Predicated region
        $region103: #{tpu_custom_call.1} parent=11 // pred_check
          _
        $region104: #{tpu_custom_call.1} parent=11 // pred_check_branch
          %193 = sbr.rel target = $region106
        $region105: #{tpu_custom_call.1} parent=11 // pred_region
          // Predicated region
          $region118: #{tpu_custom_call.1} parent=105 // pred_check
            _
          $region119: #{tpu_custom_call.1} parent=105 // pred_check_branch
            %209 = sbr.rel (0) target = $region121
          $region120: #{tpu_custom_call.1} parent=105 // pred_region
            %s211 = ssub.s32 2, 1
            loop: start=0, step=1, limit=1
            $region122: #{tpu_custom_call.1} parent=120 // loop_pre_header
              _
            $region123: #{tpu_custom_call.1} parent=120 // loop_header
              %s213 = sphi 0, %s217
              %p214 = scmp.ge.s32.totalorder %s213, 1
              %s218 = sphi %s189, %s189
              %s219 = sphi %s190, %s190
            $region124: #{tpu_custom_call.1} parent=120 // loop_header_branch
              %216 = sbr.rel (%p214) target = $region128
            $region125: #{tpu_custom_call.1} parent=120 // loop_body
              %v220 = vld [vmem:[%s218] sm:%s211]
              %221 = vst [vmem:[%s219] sm:%s211] %v220
            $region126: #{tpu_custom_call.1} parent=120 // loop_footer
              %s217 = sadd.s32 1, %s213
            $region127: #{tpu_custom_call.1} parent=120 // loop_footer_branch
              %212 = sbr.rel target = $region123
            $region128: #{tpu_custom_call.1} parent=120 // loop_exit
              _
          $region121: #{tpu_custom_call.1} parent=105 // pred_fallthru
            _
        $region106: #{tpu_custom_call.1} parent=11 // pred_fallthru
          _
        // Predicated region
        $region107: #{tpu_custom_call.1} parent=11 // pred_check
          _
        $region108: #{tpu_custom_call.1} parent=11 // pred_check_branch
          %195 = sbr.rel (0) target = $region110
        $region109: #{tpu_custom_call.1} parent=11 // pred_region
          %s197 = ssub.s32 2, 1
          loop: start=0, step=1, limit=1
          $region111: #{tpu_custom_call.1} parent=109 // loop_pre_header
            _
          $region112: #{tpu_custom_call.1} parent=109 // loop_header
            %s199 = sphi 0, %s203
            %p200 = scmp.ge.s32.totalorder %s199, 1
            %s204 = sphi %s189, %s189
            %s205 = sphi %s190, %s190
          $region113: #{tpu_custom_call.1} parent=109 // loop_header_branch
            %202 = sbr.rel (%p200) target = $region117
          $region114: #{tpu_custom_call.1} parent=109 // loop_body
            %v206 = vld [vmem:[%s204] sm:%s197]
            %207 = vst [vmem:[%s205] sm:%s197] %v206
          $region115: #{tpu_custom_call.1} parent=109 // loop_footer
            %s203 = sadd.s32 1, %s199
          $region116: #{tpu_custom_call.1} parent=109 // loop_footer_branch
            %198 = sbr.rel target = $region112
          $region117: #{tpu_custom_call.1} parent=109 // loop_exit
            _
        $region110: #{tpu_custom_call.1} parent=11 // pred_fallthru
          _
        // Predicated region
        $region129: #{tpu_custom_call.1} parent=11 // pred_check
          _
        $region130: #{tpu_custom_call.1} parent=11 // pred_check_branch
          %224 = sbr.rel (0) target = $region132
        $region131: #{tpu_custom_call.1} parent=11 // pred_region
          %225 = vsyncadd %s191, 16
        $region132: #{tpu_custom_call.1} parent=11 // pred_fallthru
          _
        %s226 = sadd.s32 %s56, 4
        %s227 = sld [smem:[#allocation5 + %s226]]
        %p228 = scmp.gt.s32.totalorder %s227, 0
        %s229 = scalar_select %p228, %s227, 0
        %p230 = scmp.lt.s32.totalorder %s229, 127
        %s231 = scalar_select %p230, %s229, 127
        %s232 = scalar_lea.vmem %s1, %s231
        %s233 = scalar_lea.vmem [#allocation2], 4
        %s234 = scalar_lea.sflag [#allocation3], 4
        // Predicated region
        $region133: #{tpu_custom_call.1} parent=11 // pred_check
          _
        $region134: #{tpu_custom_call.1} parent=11 // pred_check_branch
          %236 = sbr.rel target = $region136
        $region135: #{tpu_custom_call.1} parent=11 // pred_region
          // Predicated region
          $region148: #{tpu_custom_call.1} parent=135 // pred_check
            _
          $region149: #{tpu_custom_call.1} parent=135 // pred_check_branch
            %252 = sbr.rel (0) target = $region151
          $region150: #{tpu_custom_call.1} parent=135 // pred_region
            %s254 = ssub.s32 2, 1
            loop: start=0, step=1, limit=1
            $region152: #{tpu_custom_call.1} parent=150 // loop_pre_header
              _
            $region153: #{tpu_custom_call.1} parent=150 // loop_header
              %s256 = sphi 0, %s260
              %p257 = scmp.ge.s32.totalorder %s256, 1
              %s261 = sphi %s232, %s232
              %s262 = sphi %s233, %s233
            $region154: #{tpu_custom_call.1} parent=150 // loop_header_branch
              %259 = sbr.rel (%p257) target = $region158
            $region155: #{tpu_custom_call.1} parent=150 // loop_body
              %v263 = vld [vmem:[%s261] sm:%s254]
              %264 = vst [vmem:[%s262] sm:%s254] %v263
            $region156: #{tpu_custom_call.1} parent=150 // loop_footer
              %s260 = sadd.s32 1, %s256
            $region157: #{tpu_custom_call.1} parent=150 // loop_footer_branch
              %255 = sbr.rel target = $region153
            $region158: #{tpu_custom_call.1} parent=150 // loop_exit
              _
          $region151: #{tpu_custom_call.1} parent=135 // pred_fallthru
            _
        $region136: #{tpu_custom_call.1} parent=11 // pred_fallthru
          _
        // Predicated region
        $region137: #{tpu_custom_call.1} parent=11 // pred_check
          _
        $region138: #{tpu_custom_call.1} parent=11 // pred_check_branch
          %238 = sbr.rel (0) target = $region140
        $region139: #{tpu_custom_call.1} parent=11 // pred_region
          %s240 = ssub.s32 2, 1
          loop: start=0, step=1, limit=1
          $region141: #{tpu_custom_call.1} parent=139 // loop_pre_header
            _
          $region142: #{tpu_custom_call.1} parent=139 // loop_header
            %s242 = sphi 0, %s246
            %p243 = scmp.ge.s32.totalorder %s242, 1
            %s247 = sphi %s232, %s232
            %s248 = sphi %s233, %s233
          $region143: #{tpu_custom_call.1} parent=139 // loop_header_branch
            %245 = sbr.rel (%p243) target = $region147
          $region144: #{tpu_custom_call.1} parent=139 // loop_body
            %v249 = vld [vmem:[%s247] sm:%s240]
            %250 = vst [vmem:[%s248] sm:%s240] %v249
          $region145: #{tpu_custom_call.1} parent=139 // loop_footer
            %s246 = sadd.s32 1, %s242
          $region146: #{tpu_custom_call.1} parent=139 // loop_footer_branch
            %241 = sbr.rel target = $region142
          $region147: #{tpu_custom_call.1} parent=139 // loop_exit
            _
        $region140: #{tpu_custom_call.1} parent=11 // pred_fallthru
          _
        // Predicated region
        $region159: #{tpu_custom_call.1} parent=11 // pred_check
          _
        $region160: #{tpu_custom_call.1} parent=11 // pred_check_branch
          %267 = sbr.rel (0) target = $region162
        $region161: #{tpu_custom_call.1} parent=11 // pred_region
          %268 = vsyncadd %s234, 16
        $region162: #{tpu_custom_call.1} parent=11 // pred_fallthru
          _
        %s269 = sadd.s32 %s56, 5
        %s270 = sld [smem:[#allocation5 + %s269]]
        %p271 = scmp.gt.s32.totalorder %s270, 0
        %s272 = scalar_select %p271, %s270, 0
        %p273 = scmp.lt.s32.totalorder %s272, 127
        %s274 = scalar_select %p273, %s272, 127
        %s275 = scalar_lea.vmem %s1, %s274
        %s276 = scalar_lea.vmem [#allocation2], 5
        %s277 = scalar_lea.sflag [#allocation3], 5
        // Predicated region
        $region163: #{tpu_custom_call.1} parent=11 // pred_check
          _
        $region164: #{tpu_custom_call.1} parent=11 // pred_check_branch
          %279 = sbr.rel target = $region166
        $region165: #{tpu_custom_call.1} parent=11 // pred_region
          // Predicated region
          $region178: #{tpu_custom_call.1} parent=165 // pred_check
            _
          $region179: #{tpu_custom_call.1} parent=165 // pred_check_branch
            %295 = sbr.rel (0) target = $region181
          $region180: #{tpu_custom_call.1} parent=165 // pred_region
            %s297 = ssub.s32 2, 1
            loop: start=0, step=1, limit=1
            $region182: #{tpu_custom_call.1} parent=180 // loop_pre_header
              _
            $region183: #{tpu_custom_call.1} parent=180 // loop_header
              %s299 = sphi 0, %s303
              %p300 = scmp.ge.s32.totalorder %s299, 1
              %s304 = sphi %s275, %s275
              %s305 = sphi %s276, %s276
            $region184: #{tpu_custom_call.1} parent=180 // loop_header_branch
              %302 = sbr.rel (%p300) target = $region188
            $region185: #{tpu_custom_call.1} parent=180 // loop_body
              %v306 = vld [vmem:[%s304] sm:%s297]
              %307 = vst [vmem:[%s305] sm:%s297] %v306
            $region186: #{tpu_custom_call.1} parent=180 // loop_footer
              %s303 = sadd.s32 1, %s299
            $region187: #{tpu_custom_call.1} parent=180 // loop_footer_branch
              %298 = sbr.rel target = $region183
            $region188: #{tpu_custom_call.1} parent=180 // loop_exit
              _
          $region181: #{tpu_custom_call.1} parent=165 // pred_fallthru
            _
        $region166: #{tpu_custom_call.1} parent=11 // pred_fallthru
          _
        // Predicated region
        $region167: #{tpu_custom_call.1} parent=11 // pred_check
          _
        $region168: #{tpu_custom_call.1} parent=11 // pred_check_branch
          %281 = sbr.rel (0) target = $region170
        $region169: #{tpu_custom_call.1} parent=11 // pred_region
          %s283 = ssub.s32 2, 1
          loop: start=0, step=1, limit=1
          $region171: #{tpu_custom_call.1} parent=169 // loop_pre_header
            _
          $region172: #{tpu_custom_call.1} parent=169 // loop_header
            %s285 = sphi 0, %s289
            %p286 = scmp.ge.s32.totalorder %s285, 1
            %s290 = sphi %s275, %s275
            %s291 = sphi %s276, %s276
          $region173: #{tpu_custom_call.1} parent=169 // loop_header_branch
            %288 = sbr.rel (%p286) target = $region177
          $region174: #{tpu_custom_call.1} parent=169 // loop_body
            %v292 = vld [vmem:[%s290] sm:%s283]
            %293 = vst [vmem:[%s291] sm:%s283] %v292
          $region175: #{tpu_custom_call.1} parent=169 // loop_footer
            %s289 = sadd.s32 1, %s285
          $region176: #{tpu_custom_call.1} parent=169 // loop_footer_branch
            %284 = sbr.rel target = $region172
          $region177: #{tpu_custom_call.1} parent=169 // loop_exit
            _
        $region170: #{tpu_custom_call.1} parent=11 // pred_fallthru
          _
        // Predicated region
        $region189: #{tpu_custom_call.1} parent=11 // pred_check
          _
        $region190: #{tpu_custom_call.1} parent=11 // pred_check_branch
          %310 = sbr.rel (0) target = $region192
        $region191: #{tpu_custom_call.1} parent=11 // pred_region
          %311 = vsyncadd %s277, 16
        $region192: #{tpu_custom_call.1} parent=11 // pred_fallthru
          _
        %s312 = sadd.s32 %s56, 6
        %s313 = sld [smem:[#allocation5 + %s312]]
        %p314 = scmp.gt.s32.totalorder %s313, 0
        %s315 = scalar_select %p314, %s313, 0
        %p316 = scmp.lt.s32.totalorder %s315, 127
        %s317 = scalar_select %p316, %s315, 127
        %s318 = scalar_lea.vmem %s1, %s317
        %s319 = scalar_lea.vmem [#allocation2], 6
        %s320 = scalar_lea.sflag [#allocation3], 6
        // Predicated region
        $region193: #{tpu_custom_call.1} parent=11 // pred_check
          _
        $region194: #{tpu_custom_call.1} parent=11 // pred_check_branch
          %322 = sbr.rel target = $region196
        $region195: #{tpu_custom_call.1} parent=11 // pred_region
          // Predicated region
          $region208: #{tpu_custom_call.1} parent=195 // pred_check
            _
          $region209: #{tpu_custom_call.1} parent=195 // pred_check_branch
            %338 = sbr.rel (0) target = $region211
          $region210: #{tpu_custom_call.1} parent=195 // pred_region
            %s340 = ssub.s32 2, 1
            loop: start=0, step=1, limit=1
            $region212: #{tpu_custom_call.1} parent=210 // loop_pre_header
              _
            $region213: #{tpu_custom_call.1} parent=210 // loop_header
              %s342 = sphi 0, %s346
              %p343 = scmp.ge.s32.totalorder %s342, 1
              %s347 = sphi %s318, %s318
              %s348 = sphi %s319, %s319
            $region214: #{tpu_custom_call.1} parent=210 // loop_header_branch
              %345 = sbr.rel (%p343) target = $region218
            $region215: #{tpu_custom_call.1} parent=210 // loop_body
              %v349 = vld [vmem:[%s347] sm:%s340]
              %350 = vst [vmem:[%s348] sm:%s340] %v349
            $region216: #{tpu_custom_call.1} parent=210 // loop_footer
              %s346 = sadd.s32 1, %s342
            $region217: #{tpu_custom_call.1} parent=210 // loop_footer_branch
              %341 = sbr.rel target = $region213
            $region218: #{tpu_custom_call.1} parent=210 // loop_exit
              _
          $region211: #{tpu_custom_call.1} parent=195 // pred_fallthru
            _
        $region196: #{tpu_custom_call.1} parent=11 // pred_fallthru
          _
        // Predicated region
        $region197: #{tpu_custom_call.1} parent=11 // pred_check
          _
        $region198: #{tpu_custom_call.1} parent=11 // pred_check_branch
          %324 = sbr.rel (0) target = $region200
        $region199: #{tpu_custom_call.1} parent=11 // pred_region
          %s326 = ssub.s32 2, 1
          loop: start=0, step=1, limit=1
          $region201: #{tpu_custom_call.1} parent=199 // loop_pre_header
            _
          $region202: #{tpu_custom_call.1} parent=199 // loop_header
            %s328 = sphi 0, %s332
            %p329 = scmp.ge.s32.totalorder %s328, 1
            %s333 = sphi %s318, %s318
            %s334 = sphi %s319, %s319
          $region203: #{tpu_custom_call.1} parent=199 // loop_header_branch
            %331 = sbr.rel (%p329) target = $region207
          $region204: #{tpu_custom_call.1} parent=199 // loop_body
            %v335 = vld [vmem:[%s333] sm:%s326]
            %336 = vst [vmem:[%s334] sm:%s326] %v335
          $region205: #{tpu_custom_call.1} parent=199 // loop_footer
            %s332 = sadd.s32 1, %s328
          $region206: #{tpu_custom_call.1} parent=199 // loop_footer_branch
            %327 = sbr.rel target = $region202
          $region207: #{tpu_custom_call.1} parent=199 // loop_exit
            _
        $region200: #{tpu_custom_call.1} parent=11 // pred_fallthru
          _
        // Predicated region
        $region219: #{tpu_custom_call.1} parent=11 // pred_check
          _
        $region220: #{tpu_custom_call.1} parent=11 // pred_check_branch
          %353 = sbr.rel (0) target = $region222
        $region221: #{tpu_custom_call.1} parent=11 // pred_region
          %354 = vsyncadd %s320, 16
        $region222: #{tpu_custom_call.1} parent=11 // pred_fallthru
          _
        %s355 = sadd.s32 %s56, 7
        %s356 = sld [smem:[#allocation5 + %s355]]
        %p357 = scmp.gt.s32.totalorder %s356, 0
        %s358 = scalar_select %p357, %s356, 0
        %p359 = scmp.lt.s32.totalorder %s358, 127
        %s360 = scalar_select %p359, %s358, 127
        %s361 = scalar_lea.vmem %s1, %s360
        %s362 = scalar_lea.vmem [#allocation2], 7
        %s363 = scalar_lea.sflag [#allocation3], 7
        // Predicated region
        $region223: #{tpu_custom_call.1} parent=11 // pred_check
          _
        $region224: #{tpu_custom_call.1} parent=11 // pred_check_branch
          %365 = sbr.rel target = $region226
        $region225: #{tpu_custom_call.1} parent=11 // pred_region
          // Predicated region
          $region238: #{tpu_custom_call.1} parent=225 // pred_check
            _
          $region239: #{tpu_custom_call.1} parent=225 // pred_check_branch
            %381 = sbr.rel (0) target = $region241
          $region240: #{tpu_custom_call.1} parent=225 // pred_region
            %s383 = ssub.s32 2, 1
            loop: start=0, step=1, limit=1
            $region242: #{tpu_custom_call.1} parent=240 // loop_pre_header
              _
            $region243: #{tpu_custom_call.1} parent=240 // loop_header
              %s385 = sphi 0, %s389
              %p386 = scmp.ge.s32.totalorder %s385, 1
              %s390 = sphi %s361, %s361
              %s391 = sphi %s362, %s362
            $region244: #{tpu_custom_call.1} parent=240 // loop_header_branch
              %388 = sbr.rel (%p386) target = $region248
            $region245: #{tpu_custom_call.1} parent=240 // loop_body
              %v392 = vld [vmem:[%s390] sm:%s383]
              %393 = vst [vmem:[%s391] sm:%s383] %v392
            $region246: #{tpu_custom_call.1} parent=240 // loop_footer
              %s389 = sadd.s32 1, %s385
            $region247: #{tpu_custom_call.1} parent=240 // loop_footer_branch
              %384 = sbr.rel target = $region243
            $region248: #{tpu_custom_call.1} parent=240 // loop_exit
              _
          $region241: #{tpu_custom_call.1} parent=225 // pred_fallthru
            _
        $region226: #{tpu_custom_call.1} parent=11 // pred_fallthru
          _
        // Predicated region
        $region227: #{tpu_custom_call.1} parent=11 // pred_check
          _
        $region228: #{tpu_custom_call.1} parent=11 // pred_check_branch
          %367 = sbr.rel (0) target = $region230
        $region229: #{tpu_custom_call.1} parent=11 // pred_region
          %s369 = ssub.s32 2, 1
          loop: start=0, step=1, limit=1
          $region231: #{tpu_custom_call.1} parent=229 // loop_pre_header
            _
          $region232: #{tpu_custom_call.1} parent=229 // loop_header
            %s371 = sphi 0, %s375
            %p372 = scmp.ge.s32.totalorder %s371, 1
            %s376 = sphi %s361, %s361
            %s377 = sphi %s362, %s362
          $region233: #{tpu_custom_call.1} parent=229 // loop_header_branch
            %374 = sbr.rel (%p372) target = $region237
          $region234: #{tpu_custom_call.1} parent=229 // loop_body
            %v378 = vld [vmem:[%s376] sm:%s369]
            %379 = vst [vmem:[%s377] sm:%s369] %v378
          $region235: #{tpu_custom_call.1} parent=229 // loop_footer
            %s375 = sadd.s32 1, %s371
          $region236: #{tpu_custom_call.1} parent=229 // loop_footer_branch
            %370 = sbr.rel target = $region232
          $region237: #{tpu_custom_call.1} parent=229 // loop_exit
            _
        $region230: #{tpu_custom_call.1} parent=11 // pred_fallthru
          _
        // Predicated region
        $region249: #{tpu_custom_call.1} parent=11 // pred_check
          _
        $region250: #{tpu_custom_call.1} parent=11 // pred_check_branch
          %396 = sbr.rel (0) target = $region252
        $region251: #{tpu_custom_call.1} parent=11 // pred_region
          %397 = vsyncadd %s363, 16
        $region252: #{tpu_custom_call.1} parent=11 // pred_fallthru
          _
        %s398 = smul.u32 1, 1
        %s399 = sshll.u32 %s398, 4
        %400 = dma.done [#allocation3], %s399
        %s401 = sshll.u32 %s398, 4
        %402 = dma.done %s105, %s401
        %s403 = sshll.u32 %s398, 4
        %404 = dma.done %s148, %s403
        %s405 = sshll.u32 %s398, 4
        %406 = dma.done %s191, %s405
        %s407 = sshll.u32 %s398, 4
        %408 = dma.done %s234, %s407
        %s409 = sshll.u32 %s398, 4
        %410 = dma.done %s277, %s409
        %s411 = sshll.u32 %s398, 4
        %412 = dma.done %s320, %s411
        %s413 = sshll.u32 %s398, 4
        %414 = dma.done %s363, %s413
        %v415 = vld [vmem:[#allocation2] sm:$0xff]
        %v416 = vmul.f32 %v415, 5.656854
        %vm417 = vcmask 261120
        %418 = vst.msk [vmem:[%s55] sm:$0xff] %vm417, %v416
        %s419 = sand.u32 %s28, 1
        %s420 = scalar_lea.sflag [#allocation7], %s419
        %s421 = sand.u32 %s28, 1
        %s422 = smul.addr %s421, 8
        %s423 = scalar_lea.vmem [#allocation6], %s422
        // Predicated region
        $region253: #{tpu_custom_call.1} parent=11 // pred_check
          %p424 = pneg %p34
        $region254: #{tpu_custom_call.1} parent=11 // pred_check_branch
          %426 = sbr.rel (%p424) target = $region256
        $region255: #{tpu_custom_call.1} parent=11 // pred_region
          %428 = vsyncadd %s420, 0
          %s429 = smul.addr %s19, 8
          %s430 = scalar_lea.hbm %s2, %s429
          %s432 = sshll.u32 %s423, 4
          %s433 = int_to_ptr.vmem [resolvable:$true] %s432
          %s434 = sshll.u32 %s430, 4
          %s435 = int_to_ptr.hbm [resolvable:$true] %s434
          %437 = dma.vmem_to_hbm [thread:$0]  %s433, 128, %s435, %s420
        $region256: #{tpu_custom_call.1} parent=11 // pred_fallthru
          _
      $region12: #{tpu_custom_call.1} parent=5 // pred_fallthru
        _
      %p438 = scmp.le.s32.totalorder 1, %s19
      // Predicated region
      $region257: #{tpu_custom_call.1} parent=5 // pred_check
        %p439 = pneg %p438
      $region258: #{tpu_custom_call.1} parent=5 // pred_check_branch
        %441 = sbr.rel (%p439) target = $region260
      $region259: #{tpu_custom_call.1} parent=5 // pred_region
        %s442 = ssub.s32 %s19, 1
        // Predicated region
        $region261: #{tpu_custom_call.1} parent=259 // pred_check
          %p443 = pneg %p40
        $region262: #{tpu_custom_call.1} parent=259 // pred_check_branch
          %445 = sbr.rel (%p443) target = $region264
        $region263: #{tpu_custom_call.1} parent=259 // pred_region
          %s446 = sand.u32 %s31, 1
          %s447 = scalar_lea.sflag [#allocation7], %s446
          %s448 = sand.u32 %s31, 1
          %s449 = smul.addr %s448, 8
          %s450 = scalar_lea.vmem [#allocation6], %s449
          %452 = dma.done %s447, 128
        $region264: #{tpu_custom_call.1} parent=259 // pred_fallthru
          _
      $region260: #{tpu_custom_call.1} parent=5 // pred_fallthru
        _
    $region6: #{tpu_custom_call.1} parent=1 // loop_footer
      %s23 = sadd.s32 1, %s19
    $region7: #{tpu_custom_call.1} parent=1 // loop_footer_branch
      %18 = sbr.rel target = $region3
    $region8: #{tpu_custom_call.1} parent=1 // loop_exit
      _
    %453 = vsyncpa [#allocation7], 1
    %s454 = scalar_lea.sflag [#allocation7], 1
    %455 = vsyncpa %s454, 1
  %456 = vsyncmov [#allocation3]
  %s457 = vpop.sfrf %456
  %p458 = scmp.eq.s32.totalorder %s457, 0
  %p459 = pneg %p458
  %461 = shalt.err (%p459)
  %s462 = scalar_lea.sflag [#allocation3], 1
  %463 = vsyncmov %s462
  %s464 = vpop.sfrf %463
  %p465 = scmp.eq.s32.totalorder %s464, 0
  %p466 = pneg %p465
  %468 = shalt.err (%p466)
  %s469 = scalar_lea.sflag [#allocation3], 2
  %470 = vsyncmov %s469
  %s471 = vpop.sfrf %470
  %p472 = scmp.eq.s32.totalorder %s471, 0
  %p473 = pneg %p472
  %475 = shalt.err (%p473)
  %s476 = scalar_lea.sflag [#allocation3], 3
  %477 = vsyncmov %s476
  %s478 = vpop.sfrf %477
  %p479 = scmp.eq.s32.totalorder %s478, 0
  %p480 = pneg %p479
  %482 = shalt.err (%p480)
  %s483 = scalar_lea.sflag [#allocation3], 4
  %484 = vsyncmov %s483
  %s485 = vpop.sfrf %484
  %p486 = scmp.eq.s32.totalorder %s485, 0
  %p487 = pneg %p486
  %489 = shalt.err (%p487)
  %s490 = scalar_lea.sflag [#allocation3], 5
  %491 = vsyncmov %s490
  %s492 = vpop.sfrf %491
  %p493 = scmp.eq.s32.totalorder %s492, 0
  %p494 = pneg %p493
  %496 = shalt.err (%p494)
  %s497 = scalar_lea.sflag [#allocation3], 6
  %498 = vsyncmov %s497
  %s499 = vpop.sfrf %498
  %p500 = scmp.eq.s32.totalorder %s499, 0
  %p501 = pneg %p500
  %503 = shalt.err (%p501)
  %s504 = scalar_lea.sflag [#allocation3], 7
  %505 = vsyncmov %s504
  %s506 = vpop.sfrf %505
  %p507 = scmp.eq.s32.totalorder %s506, 0
  %p508 = pneg %p507
  %510 = shalt.err (%p508)

</llo_original>
